<compile_context>
chip_gen: v6e
topology: v6e:2x2x1
jax: 0.10.0
libtpu: 0.0.40
codegen_flags: <defaults>
</compile_context>

<pallas_src>
import jax
import jax.numpy as jnp
from jax.experimental import pallas as pl
from jax.experimental.pallas import tpu as pltpu


def wn_start_kernel(x_ref, w_ref, b_ref, o_ref):
    """Weight-normed 1x1 conv tile: out = W @ X + bias.

    x_ref: (1, C_in, T_TILE)   native-dtype NCT slice (batch dim size 1)
    w_ref: (C_out, C_in)       pre-normalized f32 weight (g * v / ||v||)
    b_ref: (C_out, 1)          f32 conv bias
    o_ref: (1, C_out, T_TILE)  lane-dense output tile (native dtype)
    """
    x = x_ref[0].astype(jnp.float32)                                # (C_in, T_TILE)
    acc = jnp.dot(w_ref[...], x, preferred_element_type=jnp.float32)  # (C_out, T_TILE)
    o_ref[0] = (acc + b_ref[...]).astype(o_ref.dtype)               # bias bcast (C_out, 1)


def _round_up(x, m):
    return ((x + m - 1) // m) * m


def _pick_t_tile(T, B, c_in, c_out, in_bytes, out_bytes,
                 vmem_budget=24 << 20, max_tile=16384, min_grid_steps=8):
    """Largest lane-dense (multiple-of-128) time tile such that:
       (a) double-buffered streaming working set stays under `vmem_budget`
           (generation-safe: fits v7x's 64 MiB VMEM with headroom),
       (b) tile <= max_tile (per-step overhead already negligible there),
       (c) when possible, B * n_time_tiles >= min_grid_steps so both v7x
           TensorCores get work (never shrinking below ~512 for overhead)."""
    per_t = 2 * (c_in * in_bytes + c_out * out_bytes)   # bytes per time-step, x2 buffers
    budget_cap = max(128, (vmem_budget // per_t) // 128 * 128)
    t128 = _round_up(T, 128)
    t = min(t128, budget_cap, max_tile)
    t = max(128, (t // 128) * 128)
    steps = B * (-(-t128 // t))
    if steps < min_grid_steps:
        need_per_batch = -(-min_grid_steps // B)
        t_par = max(128, (t128 // need_per_batch) // 128 * 128)
        t = min(t, max(t_par, min(512, t)))
    return t


def wn_forward(forward_input, v, g, b, *, t_tile=None, out_dtype=None):
    """JAX wrapper mirroring WN.forward.  forward_input = (audio, spect).

    Audio is streamed in its native dtype (pass bf16 audio for ~2x on the HBM
    roofline); accumulation is always f32.  `out_dtype` defaults to the audio
    dtype; pass jnp.bfloat16 explicitly to stream a bf16 output from f32 input.
    """
    audio, _spect = forward_input          # spect unused, exactly like the module
    B, C_in, T = audio.shape
    C_out = v.shape[0]
    if out_dtype is None:
        out_dtype = audio.dtype

    # Hoist weight-norm out of the per-tile path (tiny, parameter-only work).
    # TODO(synk): no epsilon, matching torch.nn.utils.weight_norm (div-by-zero
    # for an all-zero row of v, same as the reference module).
    v32 = v.astype(jnp.float32)
    norm = jnp.sqrt(jnp.sum(v32 * v32, axis=1, keepdims=True))      # (C_out, 1)
    w = (g.astype(jnp.float32) * v32 / norm)                        # (C_out, C_in) f32
    bias = b.astype(jnp.float32)                                    # (C_out, 1)   f32

    in_bytes = jnp.dtype(audio.dtype).itemsize
    out_bytes = jnp.dtype(out_dtype).itemsize
    if t_tile is None:
        t_tile = _pick_t_tile(T, B, C_in, C_out, in_bytes, out_bytes)

    # Keep stores lane-dense and tiles bounded: pad T up to a tile multiple.
    T_pad = _round_up(T, t_tile)
    x = audio
    if T_pad != T:
        x = jnp.pad(audio, ((0, 0), (0, 0), (0, T_pad - T)))

    grid = (B, T_pad // t_tile)

    out = pl.pallas_call(
        wn_start_kernel,
        out_shape=jax.ShapeDtypeStruct((B, C_out, T_pad), out_dtype),
        grid=grid,
        in_specs=[
            pl.BlockSpec((1, C_in, t_tile), lambda bi, ti: (bi, 0, ti)),
            pl.BlockSpec((C_out, C_in), lambda bi, ti: (0, 0)),
            pl.BlockSpec((C_out, 1), lambda bi, ti: (0, 0)),
        ],
        out_specs=pl.BlockSpec((1, C_out, t_tile), lambda bi, ti: (bi, 0, ti)),
        compiler_params=pltpu.CompilerParams(
            dimension_semantics=("parallel", "parallel"),
            vmem_limit_bytes=32 << 20),
    )(x, w, bias)

    if T_pad != T:
        out = out[:, :, :T]
    return out


if __name__ == "__main__":
    # Small shapes consistent with the module's forward.  Audio is bf16 to
    # exercise the optimized (halved-bytes) streaming path; accumulation stays
    # f32 inside the kernel.
    B, C_in, C_out, T = 2, 4, 32, 256

    key = jax.random.PRNGKey(0)
    k_audio, k_spect, k_v, k_g, k_b = jax.random.split(key, 5)

    audio = jax.random.normal(k_audio, (B, C_in, T), dtype=jnp.float32)
    audio = audio.astype(jnp.bfloat16)                                 # native bf16 input
    spect = jax.random.normal(k_spect, (B, 8, T), dtype=jnp.float32)   # unused by forward

    # Conv2d(C_in, C_out, 1) with weight_norm parameters:
    #   v: (C_out, C_in) raw direction (from the (C_out, C_in, 1, 1) kernel)
    #   g: (C_out, 1)    weight-norm gain
    #   b: (C_out, 1)    conv bias
    v = jax.random.normal(k_v, (C_out, C_in), dtype=jnp.float32) * 0.1
    g = jax.random.uniform(k_g, (C_out, 1), dtype=jnp.float32,
                           minval=0.5, maxval=1.5)
    b = jax.random.normal(k_b, (C_out, 1), dtype=jnp.float32) * 0.05

    out = wn_forward((audio, spect), v, g, b)
    out = jax.block_until_ready(out)

    # Pure-JAX f32 reference of the weight-norm 1x1 conv on the same bf16 audio.
    w_ref = g * v / jnp.sqrt(jnp.sum(v * v, axis=1, keepdims=True))    # (C_out, C_in)
    ref = jnp.einsum("oc,bct->bot", w_ref,
                     audio.astype(jnp.float32)) + b[None, :, :]        # (B, C_out, T)

    assert out.shape == (B, C_out, T)
    assert out.dtype == audio.dtype
    # Output is bf16-rounded; accumulation is f32, so error is ~one bf16 ulp.
    assert jnp.allclose(out.astype(jnp.float32), ref, atol=1e-2, rtol=1e-2)

    print("KERNEL_OK")
</pallas_src>

<mosaic_0001>
module attributes {stable_mosaic.version = 11 : i64} {
  func.func @wn_start_kernel(%arg0: i32, %arg1: i32, %arg2: memref<1x4x256xbf16, #tpu.memory_space<vmem>>, %arg3: memref<32x4xf32, #tpu.memory_space<vmem>>, %arg4: memref<32x1xf32, #tpu.memory_space<vmem>>, %arg5: memref<1x32x256xbf16, #tpu.memory_space<vmem>>) attributes {dimension_semantics = [#tpu.dimension_semantics<parallel>, #tpu.dimension_semantics<parallel>], iteration_bounds = array<i64: 2, 1>, scalar_prefetch = 0 : i64, scratch_operands = 0 : i64, tpu.core_type = #tpu.core_type<tc>, window_params = [{transform_indices = @transform_0, window_bounds = array<i64: 1, 4, 256>}, {pipeline_mode = #tpu.pipeline_mode<synchronous>, transform_indices = @transform_1, window_bounds = array<i64: 32, 4>}, {pipeline_mode = #tpu.pipeline_mode<synchronous>, transform_indices = @transform_2, window_bounds = array<i64: 32, 1>}, {transform_indices = @transform_3, window_bounds = array<i64: 1, 32, 256>}]} {
    %c0 = arith.constant 0 : index
    %c0_0 = arith.constant 0 : index
    %c0_1 = arith.constant 0 : index
    %0 = vector.load %arg2[%c0, %c0_0, %c0_1] : memref<1x4x256xbf16, #tpu.memory_space<vmem>>, vector<1x4x256xbf16>
    %1 = vector.shape_cast %0 : vector<1x4x256xbf16> to vector<4x256xbf16>
    %2 = arith.extf %1 : vector<4x256xbf16> to vector<4x256xf32>
    %c0_2 = arith.constant 0 : index
    %c0_3 = arith.constant 0 : index
    %3 = vector.load %arg3[%c0_2, %c0_3] : memref<32x4xf32, #tpu.memory_space<vmem>>, vector<32x4xf32>
    %cst = arith.constant dense<0.000000e+00> : vector<32x256xf32>
    %4 = tpu.matmul %3, %2, %cst {dimension_numbers = #tpu.dot_dimension_numbers<[1], [0], [0], [1], [0, 0, 1, 1], [], []>} : vector<32x4xf32>, vector<4x256xf32>, vector<32x256xf32> -> vector<32x256xf32>
    %c0_4 = arith.constant 0 : index
    %c0_5 = arith.constant 0 : index
    %5 = vector.load %arg4[%c0_4, %c0_5] : memref<32x1xf32, #tpu.memory_space<vmem>>, vector<32x1xf32>
    %6 = vector.broadcast %5 : vector<32x1xf32> to vector<32x256xf32>
    %7 = arith.addf %4, %6 : vector<32x256xf32>
    %8 = arith.truncf %7 : vector<32x256xf32> to vector<32x256xbf16>
    %c0_6 = arith.constant 0 : index
    %c0_7 = arith.constant 0 : index
    %c0_8 = arith.constant 0 : index
    %9 = vector.load %arg5[%c0_6, %c0_7, %c0_8] : memref<1x32x256xbf16, #tpu.memory_space<vmem>>, vector<1x32x256xbf16>
    %10 = vector.shape_cast %9 : vector<1x32x256xbf16> to vector<32x256xbf16>
    %11 = vector.shape_cast %8 : vector<32x256xbf16> to vector<1x32x256xbf16>
    tpu.vector_store %arg5[%c0_6, %c0_7, %c0_8], %11 {strides = array<i32>} : memref<1x32x256xbf16, #tpu.memory_space<vmem>>, vector<1x32x256xbf16>,
    return
  }
  func.func @transform_0(%arg0: i32, %arg1: i32) -> (i32, i32, i32) {
    %c0_i32 = arith.constant 0 : i32
    %c0_i32_0 = arith.constant 0 : i32
    return %arg0, %c0_i32, %arg1 : i32, i32, i32
  }
  func.func @transform_1(%arg0: i32, %arg1: i32) -> (i32, i32) {
    %c0_i32 = arith.constant 0 : i32
    %c0_i32_0 = arith.constant 0 : i32
    %c0_i32_1 = arith.constant 0 : i32
    return %c0_i32, %c0_i32_0 : i32, i32
  }
  func.func @transform_2(%arg0: i32, %arg1: i32) -> (i32, i32) {
    %c0_i32 = arith.constant 0 : i32
    %c0_i32_0 = arith.constant 0 : i32
    %c0_i32_1 = arith.constant 0 : i32
    return %c0_i32, %c0_i32_0 : i32, i32
  }
  func.func @transform_3(%arg0: i32, %arg1: i32) -> (i32, i32, i32) {
    %c0_i32 = arith.constant 0 : i32
    %c0_i32_0 = arith.constant 0 : i32
    return %arg0, %c0_i32, %arg1 : i32, i32, i32
  }
}

</mosaic_0001>

<llo_original>
// kernel: tpu_custom_call.1
$region0: #{tpu_custom_call.1}
  #allocation0 [shape = 'u32[]', space=smem, size = 0x4, offset = 0x4, fixed_abs, tag = 'smem constant byte address 0x4 - core index']
  #allocation1 [shape = 'u32[144,128]{1,0:T(1,128)}', space=vmem, size = 0x12000, scoped, tag = 'internal scratch']
  %s0 = inlined_call_operand.vmem [shape: bf16[2,4,256], index: 0, kind: input, shape index: {}]
  %s1 = inlined_call_operand.vmem [shape: f32[32,4], index: 1, kind: input, shape index: {}]
  %s2 = inlined_call_operand.vmem [shape: f32[32,1], index: 2, kind: input, shape index: {}]
  %s3 = inlined_call_operand.hbm [shape: bf16[2,32,256], index: 3, kind: output, shape index: {}]
  %s4 = sld [smem:[#allocation0]]
  $region45: #{tpu_custom_call.1} parent=0
    _
  %s6 = ssub.s32 1, %s4
  %s7 = scalar_select 0, %s6, %s4
  $region1: #{tpu_custom_call.1} parent=0
    #allocation2 [shape = 'u8[32768]{0}', space=vmem, size = 0x8000, scoped, tag = 'output window, operand 0']
    #allocation3 [shape = 's32[2]{0}', space=sflag, size = 0x8, scoped, tag = 'scoped memory for tpu_custom_call.1']
    %8 = vsyncpa [#allocation3], 0
    %s9 = scalar_lea.sflag [#allocation3], 1
    %10 = vsyncpa %s9, 0
    loop: start=0, step=1, limit=4
    $region2: #{tpu_custom_call.1} parent=1 // loop_pre_header
      _
    $region3: #{tpu_custom_call.1} parent=1 // loop_header
      %s12 = sphi 0, %s16
      %p13 = scmp.ge.s32.totalorder %s12, 4
      %s19 = sphi 0, %s31
      %s20 = sphi 0, %s27
      %s21 = sphi 0, %s19
      %s22 = sphi 0, %s20
      %s23 = sphi 0, %s21
      %s24 = sphi 0, %s22
      %s36 = sphi 0, %s38
      %s39 = sphi 0, %s36
      %s40 = sphi 0, %s39
      %s56 = sphi 0, %s40
      %s60 = sphi 0, %s60
      %s62 = sphi 0, %s60
      %s63 = sphi 0, %s62
      %s77 = sphi 0, %s63
      %s81 = sphi 0, %s81
      %s83 = sphi 0, %s81
      %s84 = sphi 0, %s83
      %s98 = sphi 0, %s84
      %s106 = sphi 0, %s108
      %s109 = sphi 0, %s106
      %s110 = sphi 0, %s109
      %s126 = sphi 0, %s110
    $region4: #{tpu_custom_call.1} parent=1 // loop_header_branch
      %15 = sbr.rel (%p13) target = $region8
    $region5: #{tpu_custom_call.1} parent=1 // loop_body
      %s17 = ssub.s32 %s12, 1
      %s18 = ssub.s32 %s12, 2
      %s25 = sadd.s32 1, %s20
      %p26 = scmp.ge.s32.totalorder %s25, 1
      %s27 = scalar_select %p26, 0, %s25
      %s28 = sadd.s32 1, %s19
      %s29 = scalar_select %p26, %s28, %s19
      %p30 = scmp.ge.s32.totalorder %s29, 2
      %s31 = scalar_select %p30, 0, %s29
      %s32 = ssub.s32 %s19, %s31
      %s33 = ssub.s32 %s20, %s27
      %s34 = sor.u32 %s32, %s33
      %p35 = scmp.eq.s32.totalorder %s34, 0
      %s37 = sadd.s32 %s36, 1
      %s38 = scalar_select %p35, %s36, %s37
      %p41 = pneg %p35
      %p42 = scmp.eq.s32.totalorder %s12, 1
      %p43 = por %p41, %p42
      %p44 = scmp.ne.s32.totalorder %s36, %s39
      %p45 = scmp.eq.s32.totalorder %s12, 0
      %p46 = por %p44, %p45
      %p47 = scmp.ne.s32.totalorder %s36, %s39
      %p48 = scmp.eq.s32.totalorder %s17, 1
      %p49 = por %p47, %p48
      %p50 = scmp.ne.s32.totalorder %s39, %s40
      %p51 = scmp.eq.s32.totalorder %s17, 0
      %p52 = por %p50, %p51
      %p53 = scmp.ne.s32.totalorder %s39, %s40
      %p54 = scmp.eq.s32.totalorder %s18, 1
      %p55 = por %p53, %p54
      %p57 = scmp.ne.s32.totalorder %s40, %s56
      %p58 = scmp.eq.s32.totalorder %s18, 0
      %p59 = por %p57, %p58
      %s61 = sadd.s32 %s60, 1
      %p64 = scmp.eq.s32.totalorder %s12, 1
      %p65 = scmp.ne.s32.totalorder %s60, %s62
      %p66 = scmp.eq.s32.totalorder %s12, 0
      %p67 = por %p65, %p66
      %p68 = scmp.ne.s32.totalorder %s60, %s62
      %p69 = scmp.eq.s32.totalorder %s17, 1
      %p70 = por %p68, %p69
      %p71 = scmp.ne.s32.totalorder %s62, %s63
      %p72 = scmp.eq.s32.totalorder %s17, 0
      %p73 = por %p71, %p72
      %p74 = scmp.ne.s32.totalorder %s62, %s63
      %p75 = scmp.eq.s32.totalorder %s18, 1
      %p76 = por %p74, %p75
      %p78 = scmp.ne.s32.totalorder %s63, %s77
      %p79 = scmp.eq.s32.totalorder %s18, 0
      %p80 = por %p78, %p79
      %s82 = sadd.s32 %s81, 1
      %p85 = scmp.eq.s32.totalorder %s12, 1
      %p86 = scmp.ne.s32.totalorder %s81, %s83
      %p87 = scmp.eq.s32.totalorder %s12, 0
      %p88 = por %p86, %p87
      %p89 = scmp.ne.s32.totalorder %s81, %s83
      %p90 = scmp.eq.s32.totalorder %s17, 1
      %p91 = por %p89, %p90
      %p92 = scmp.ne.s32.totalorder %s83, %s84
      %p93 = scmp.eq.s32.totalorder %s17, 0
      %p94 = por %p92, %p93
      %p95 = scmp.ne.s32.totalorder %s83, %s84
      %p96 = scmp.eq.s32.totalorder %s18, 1
      %p97 = por %p95, %p96
      %p99 = scmp.ne.s32.totalorder %s84, %s98
      %p100 = scmp.eq.s32.totalorder %s18, 0
      %p101 = por %p99, %p100
      %s102 = ssub.s32 %s19, %s31
      %s103 = ssub.s32 %s20, %s27
      %s104 = sor.u32 %s102, %s103
      %p105 = scmp.eq.s32.totalorder %s104, 0
      %s107 = sadd.s32 %s106, 1
      %s108 = scalar_select %p105, %s106, %s107
      %p111 = pneg %p105
      %p112 = scmp.eq.s32.totalorder %s12, 1
      %p113 = por %p111, %p112
      %p114 = scmp.ne.s32.totalorder %s106, %s109
      %p115 = scmp.eq.s32.totalorder %s12, 0
      %p116 = por %p114, %p115
      %p117 = scmp.ne.s32.totalorder %s106, %s109
      %p118 = scmp.eq.s32.totalorder %s17, 1
      %p119 = por %p117, %p118
      %p120 = scmp.ne.s32.totalorder %s109, %s110
      %p121 = scmp.eq.s32.totalorder %s17, 0
      %p122 = por %p120, %p121
      %p123 = scmp.ne.s32.totalorder %s109, %s110
      %p124 = scmp.eq.s32.totalorder %s18, 1
      %p125 = por %p123, %p124
      %p127 = scmp.ne.s32.totalorder %s110, %s126
      %p128 = scmp.eq.s32.totalorder %s18, 0
      %p129 = por %p127, %p128
      %p130 = scmp.le.s32.totalorder 1, %s12
      %p131 = scmp.lt.s32.totalorder %s12, 3
      %p132 = pnand %p130, %p131
      %p133 = pneg %p132
      // Predicated region
      $region9: #{tpu_custom_call.1} parent=5 // pred_check
        _
      $region10: #{tpu_custom_call.1} parent=5 // pred_check_branch
        %135 = sbr.rel (%p132) target = $region12
      $region11: #{tpu_custom_call.1} parent=5 // pred_region
        %s136 = ssub.s32 %s12, 1
        // Predicated region
        $region13: #{tpu_custom_call.1} parent=11 // pred_check
          %p137 = pneg %p73
        $region14: #{tpu_custom_call.1} parent=11 // pred_check_branch
          %139 = sbr.rel (%p137) target = $region16
        $region15: #{tpu_custom_call.1} parent=11 // pred_region
          _
        $region16: #{tpu_custom_call.1} parent=11 // pred_fallthru
          _
        // Predicated region
        $region17: #{tpu_custom_call.1} parent=11 // pred_check
          %p140 = pneg %p94
        $region18: #{tpu_custom_call.1} parent=11 // pred_check_branch
          %142 = sbr.rel (%p140) target = $region20
        $region19: #{tpu_custom_call.1} parent=11 // pred_region
          _
        $region20: #{tpu_custom_call.1} parent=11 // pred_fallthru
          _
      $region12: #{tpu_custom_call.1} parent=5 // pred_fallthru
        _
      %p143 = scmp.lt.s32.totalorder %s12, 2
      // Predicated region
      $region21: #{tpu_custom_call.1} parent=5 // pred_check
        %p144 = pneg %p143
      $region22: #{tpu_custom_call.1} parent=5 // pred_check_branch
        %146 = sbr.rel (%p144) target = $region24
      $region23: #{tpu_custom_call.1} parent=5 // pred_region
        // Predicated region
        $region25: #{tpu_custom_call.1} parent=23 // pred_check
          %p147 = pneg %p46
        $region26: #{tpu_custom_call.1} parent=23 // pred_check_branch
          %149 = sbr.rel (%p147) target = $region28
        $region27: #{tpu_custom_call.1} parent=23 // pred_region
          %s150 = smul.u32 2, %s20
          %p151 = scmp.lt.s32.totalorder %s19, 1
          %s152 = scalar_select %p151, %s19, 1
          %p153 = scmp.lt.s32.totalorder %s150, 1
          %s154 = scalar_select %p153, %s150, 1
          %s155 = smul.addr %s152, 2
          %s156 = sadd.s32 %s154, %s155
          %s157 = smul.addr %s156, 2
          %s158 = scalar_lea.vmem %s0, %s157
          %s159 = smul.u32 2, %s20
        $region28: #{tpu_custom_call.1} parent=23 // pred_fallthru
          _
      $region24: #{tpu_custom_call.1} parent=5 // pred_fallthru
        _
      %p160 = scmp.le.s32.totalorder 1, %s12
      %p161 = scmp.lt.s32.totalorder %s12, 3
      %p162 = pnand %p160, %p161
      %p163 = pneg %p162
      // Predicated region
      $region29: #{tpu_custom_call.1} parent=5 // pred_check
        _
      $region30: #{tpu_custom_call.1} parent=5 // pred_check_branch
        %165 = sbr.rel (%p162) target = $region32
      $region31: #{tpu_custom_call.1} parent=5 // pred_region
        %s166 = ssub.s32 %s12, 1
        %s167 = smul.u32 2, %s22
        %p168 = scmp.lt.s32.totalorder %s21, 1
        %s169 = scalar_select %p168, %s21, 1
        %p170 = scmp.lt.s32.totalorder %s167, 1
        %s171 = scalar_select %p170, %s167, 1
        %s172 = smul.addr %s169, 2
        %s173 = sadd.s32 %s171, %s172
        %s174 = smul.addr %s173, 2
        %s175 = scalar_lea.vmem %s0, %s174
        %p176 = pneg %p52
        %p177 = pneg %p49
        %p178 = pneg %p73
        %p179 = pneg %p70
        %p180 = pneg %p94
        %p181 = pneg %p91
        %p182 = pneg %p122
        %p183 = pneg %p119
        %s184 = sand.u32 %s109, 1
        %s185 = scalar_lea.sflag [#allocation3], %s184
        %s186 = sand.u32 %s109, 1
        %s187 = smul.addr %s186, 32
        %s188 = scalar_lea.vmem [#allocation2], %s187
        %s189 = smul.u32 2, %s22
        %p190 = scmp.lt.s32.totalorder %s21, 1
        %s191 = scalar_select %p190, %s21, 1
        %p192 = scmp.lt.s32.totalorder %s189, 1
        %s193 = scalar_select %p192, %s189, 1
        %s194 = smul.addr %s191, 2
        %s195 = sadd.s32 %s193, %s194
        %s196 = smul.addr %s195, 2
        %s197 = scalar_lea.vmem %s0, %s196
        %s198 = smul.u32 2, %s22
        %s199 = smul.u32 2, %s22
        %v200 = vld [vmem:[%s197] sm:$0xf]
        %v201 = vunpack.c.l.bf16 %v200
        %v202 = vld [vmem:[%s1] sm:$0xff]
        %v203 = vld [vmem:[%s1 + $0x8] sm:$0xff]
        %v204 = vld [vmem:[%s1 + $0x10] sm:$0xff]
        %v205 = vld [vmem:[%s1 + $0x18] sm:$0xff]
        %v206 = vld [vmem:[%s2] sm:$0xff]
        %v207 = vld [vmem:[%s2 + $0x8] sm:$0xff]
        %v208 = vld [vmem:[%s2 + $0x10] sm:$0xff]
        %v209 = vld [vmem:[%s2 + $0x18] sm:$0xff]
        %211 = vset.pattern.permute.xlu0 0
        %212 = vperm.xlu0 %211, %v206
        %v213 = vpop.permute.xlu0 %212
        %216 = vset.pattern.permute.xlu0 0
        %217 = vperm.xlu0 %216, %v207
        %v218 = vpop.permute.xlu0 %217
        %221 = vset.pattern.permute.xlu0 0
        %222 = vperm.xlu0 %221, %v208
        %v223 = vpop.permute.xlu0 %222
        %226 = vset.pattern.permute.xlu0 0
        %227 = vperm.xlu0 %226, %v209
        %v228 = vpop.permute.xlu0 %227
        %v231 = vcombine.high %v201, %v201
        %vm232 = vcmask 31744
        %v234 = vsel %vm232, %v202, 0
        %v237 = vsel %vm232, %v203, 0
        %v240 = vsel %vm232, %v204, 0
        %v243 = vsel %vm232, %v205, 0
        %vm245 = vcmask 1043456
        %v246 = vsel %vm245, %v201, 0
        %v248 = vsel %vm245, %v231, 0
        %250 = vmatprep.subr.mxu0 0.0
        %251 = vmatpush1.msra.mxu0 0.0
        %252 = vmatprep.subr.mxu0 0.0
        %253 = vmatpush1.msra.mxu0 0.0
        %254 = vmatprep.subr.mxu0 0.0
        %255 = vmatpush1.msra.mxu0 0.0
        %256 = vmatprep.subr.mxu0 0.0
        %257 = vmatpush1.msra.mxu0 0.0
        %258 = vmatprep.subr.mxu0 0.0
        %259 = vmatpush1.msra.mxu0 0.0
        %260 = vmatprep.subr.mxu0 0.0
        %261 = vmatpush1.msra.mxu0 0.0
        %262 = vmatprep.subr.mxu0 0.0
        %263 = vmatpush1.msra.mxu0 0.0
        %264 = vmatprep.subr.mxu0 0.0
        %265 = vmatpush1.msra.mxu0 0.0
        %266 = vmatprep.subr.mxu0 0.0
        %267 = vmatpush1.msra.mxu0 0.0
        %268 = vmatprep.subr.mxu0 0.0
        %269 = vmatpush1.msra.mxu0 0.0
        %270 = vmatprep.subr.mxu0 0.0
        %271 = vmatpush1.msra.mxu0 0.0
        %272 = vmatprep.subr.mxu0 0.0
        %273 = vmatpush1.msra.mxu0 0.0
        %274 = vmatprep.subr.mxu0 0.0
        %275 = vmatpush1.msra.mxu0 0.0
        %276 = vmatprep.subr.mxu0 0.0
        %277 = vmatpush1.msra.mxu0 0.0
        %278 = vmatprep.subr.mxu0 0.0
        %279 = vmatpush1.msra.mxu0 0.0
        %280 = vmatprep.subr.mxu0 %v248
        %281 = vmatpush1.msra.mxu0 %v246
        %282 = vmatprep.subr.mxu0 0.0
        %283 = vmatpush2.msra.mxu0 0.0
        %284 = vmatprep.subr.mxu0 0.0
        %285 = vmatpush2.msra.mxu0 0.0
        %286 = vmatprep.subr.mxu0 0.0
        %287 = vmatpush2.msra.mxu0 0.0
        %288 = vmatprep.subr.mxu0 0.0
        %289 = vmatpush2.msra.mxu0 0.0
        %290 = vmatprep.subr.mxu0 0.0
        %291 = vmatpush2.msra.mxu0 0.0
        %292 = vmatprep.subr.mxu0 0.0
        %293 = vmatpush2.msra.mxu0 0.0
        %294 = vmatprep.subr.mxu0 0.0
        %295 = vmatpush2.msra.mxu0 0.0
        %296 = vmatprep.subr.mxu0 0.0
        %297 = vmatpush2.msra.mxu0 0.0
        %298 = vmatprep.subr.mxu0 0.0
        %299 = vmatpush2.msra.mxu0 0.0
        %300 = vmatprep.subr.mxu0 0.0
        %301 = vmatpush2.msra.mxu0 0.0
        %302 = vmatprep.subr.mxu0 0.0
        %303 = vmatpush2.msra.mxu0 0.0
        %304 = vmatprep.subr.mxu0 0.0
        %305 = vmatpush2.msra.mxu0 0.0
        %306 = vmatprep.subr.mxu0 0.0
        %307 = vmatpush2.msra.mxu0 0.0
        %308 = vmatprep.subr.mxu0 0.0
        %309 = vmatpush2.msra.mxu0 0.0
        %310 = vmatprep.subr.mxu0 0.0
        %311 = vmatpush2.msra.mxu0 0.0
        %312 = vmatprep.subr.mxu0 0.0
        %313 = vmatpush2.msra.mxu0 0.0
        %314 = vmatprep.mubr.f32.mxu0 0.0
        %315 = vmatmul.mubr.f32.gmra.mxu0 %v234
        %v316 = vpop.f32.mrf.mxu0
        %v317 = vadd.f32 %v213, %v316
        %v318 = vpop.f32.mrf.mxu0
        %v319 = vadd.f32 %v213, %v318
        %320 = vmatprep.mubr.f32.mxu0 0.0
        %321 = vmatmul.mubr.f32.gmra.mxu0 %v237
        %v322 = vpop.f32.mrf.mxu0
        %v323 = vadd.f32 %v218, %v322
        %v324 = vpop.f32.mrf.mxu0
        %v325 = vadd.f32 %v218, %v324
        %326 = vmatprep.mubr.f32.mxu0 0.0
        %327 = vmatmul.mubr.f32.gmra.mxu0 %v240
        %v328 = vpop.f32.mrf.mxu0
        %v329 = vadd.f32 %v223, %v328
        %v330 = vpop.f32.mrf.mxu0
        %v331 = vadd.f32 %v223, %v330
        %332 = vmatprep.mubr.f32.mxu0 0.0
        %333 = vmatmul.mubr.f32.gmra.mxu0 %v243
        %v334 = vpop.f32.mrf.mxu0
        %v335 = vadd.f32 %v228, %v334
        %v336 = vpop.f32.mrf.mxu0
        %v337 = vadd.f32 %v228, %v336
        %338 = vdwg.mxu0
        %v339 = vpack.c.bf16 %v323, %v317
        %v340 = vpack.c.bf16 %v325, %v319
        %v341 = vpack.c.bf16 %v335, %v329
        %v342 = vpack.c.bf16 %v337, %v331
        %v347 = vunpack.c.l.b16 %v339
        %v348 = vunpack.c.l.b16 %v340
        %v349 = vunpack.c.h.b16 %v339
        %v350 = vunpack.c.h.b16 %v340
        %v351 = vunpack.c.l.b16 %v341
        %v352 = vunpack.c.l.b16 %v342
        %v353 = vunpack.c.h.b16 %v341
        %v354 = vunpack.c.h.b16 %v342
        %v355 = vpack.c.b16 %v348, %v347
        %v356 = vpack.c.b16 %v350, %v349
        %v357 = vpack.c.b16 %v352, %v351
        %v358 = vpack.c.b16 %v354, %v353
        %363 = vst [vmem:[%s188] sm:$0xff] %v355
        %364 = vst [vmem:[%s188 + $0x8] sm:$0xff] %v356
        %365 = vst [vmem:[%s188 + $0x10] sm:$0xff] %v357
        %366 = vst [vmem:[%s188 + $0x18] sm:$0xff] %v358
        %s367 = sand.u32 %s109, 1
        %s368 = scalar_lea.sflag [#allocation3], %s367
        %s369 = sand.u32 %s109, 1
        %s370 = smul.addr %s369, 32
        %s371 = scalar_lea.vmem [#allocation2], %s370
        // Predicated region
        $region33: #{tpu_custom_call.1} parent=31 // pred_check
          %p372 = pneg %p119
        $region34: #{tpu_custom_call.1} parent=31 // pred_check_branch
          %374 = sbr.rel (%p372) target = $region36
        $region35: #{tpu_custom_call.1} parent=31 // pred_region
          %s375 = smul.u32 2, %s22
          %s377 = ssub.s32 512, 512
          %378 = vsyncadd %s368, %s377
          %s379 = smul.addr %s21, 8
          %s380 = sadd.s32 %s375, %s379
          %s381 = smul.addr %s380, 64
          %s382 = scalar_lea.hbm %s3, %s381
          %s383 = sshll.u32 %s371, 4
          %s384 = int_to_ptr.vmem [resolvable:$true] %s383
          %389 = dma.vmem_to_hbm [thread:$0]  %s384, 512, %s382, %s368, 128, 128, 8
        $region36: #{tpu_custom_call.1} parent=31 // pred_fallthru
          _
      $region32: #{tpu_custom_call.1} parent=5 // pred_fallthru
        _
      %p390 = scmp.le.s32.totalorder 2, %s12
      // Predicated region
      $region37: #{tpu_custom_call.1} parent=5 // pred_check
        %p391 = pneg %p390
      $region38: #{tpu_custom_call.1} parent=5 // pred_check_branch
        %393 = sbr.rel (%p391) target = $region40
      $region39: #{tpu_custom_call.1} parent=5 // pred_region
        %s394 = ssub.s32 %s12, 2
        // Predicated region
        $region41: #{tpu_custom_call.1} parent=39 // pred_check
          %p395 = pneg %p125
        $region42: #{tpu_custom_call.1} parent=39 // pred_check_branch
          %397 = sbr.rel (%p395) target = $region44
        $region43: #{tpu_custom_call.1} parent=39 // pred_region
          %s398 = sand.u32 %s110, 1
          %s399 = scalar_lea.sflag [#allocation3], %s398
          %s400 = sand.u32 %s110, 1
          %s401 = smul.addr %s400, 32
          %s402 = scalar_lea.vmem [#allocation2], %s401
          %403 = dma.done %s399, 512
        $region44: #{tpu_custom_call.1} parent=39 // pred_fallthru
          _
      $region40: #{tpu_custom_call.1} parent=5 // pred_fallthru
        _
    $region6: #{tpu_custom_call.1} parent=1 // loop_footer
      %s16 = sadd.s32 1, %s12
    $region7: #{tpu_custom_call.1} parent=1 // loop_footer_branch
      %11 = sbr.rel target = $region3
    $region8: #{tpu_custom_call.1} parent=1 // loop_exit
      _
    %404 = vsyncpa [#allocation3], 1
    %s405 = scalar_lea.sflag [#allocation3], 1
    %406 = vsyncpa %s405, 1

</llo_original>
